<compile_context>
chip_gen: v7x
topology: tpu7x:2x2x1
jax: 0.10.0
libtpu: 0.0.40
codegen_flags: <defaults>
</compile_context>

<pallas_src>
import functools

import jax
import jax.numpy as jnp
from jax.experimental import pallas as pl
from jax.experimental.pallas import tpu as pltpu


NUM_HEADS = 2
LN_EPS = 1e-12


def _row_tile(m):
    """Largest tile (<=512, multiple of 8) dividing m that gives >=2 grid steps."""
    fallback = m
    for tm in (512, 256, 128, 64, 32, 16, 8):
        if m % tm == 0:
            if m // tm >= 2:
                return tm
            fallback = tm
    return fallback


def _col_tile(f):
    """Largest lane-aligned chunk (<=1024, multiple of 128) dividing f, else f."""
    for tf in (1024, 512, 256, 128):
        if f % tf == 0:
            return tf
    return f


def _layernorm_rows(y, gamma, beta, eps):
    """One-pass LayerNorm over the last axis of a f32 (rows, D) value."""
    n = y.shape[-1]
    inv_n = 1.0 / n
    s1 = jnp.sum(y, axis=-1, keepdims=True)
    s2 = jnp.sum(y * y, axis=-1, keepdims=True)
    mu = s1 * inv_n
    var = jnp.maximum(s2 * inv_n - mu * mu, 0.0)
    return (y - mu) * jax.lax.rsqrt(var + eps) * gamma + beta


# ----- fused attention block: QKV proj + attention + out-proj + res + LN -----

def _attn_block_kernel(x_ref, bias_ref, wq_ref, wk_ref, wv_ref,
                       bq_ref, bk_ref, bv_ref, wo_ref, bo_ref,
                       g_ref, bb_ref, o_ref, acc_ref, *, scale, eps):
    head = pl.program_id(1)
    x = x_ref[0]                                       # (S, D) bf16

    @pl.when(head == 0)
    def _():
        # residual + output-projection bias, added once per batch block
        acc_ref[...] = x.astype(jnp.float32) + bo_ref[...]

    # Per-head projections (head-major weights -> no lane slicing).
    q = (jnp.dot(x, wq_ref[0], preferred_element_type=jnp.float32)
         + bq_ref[0]).astype(x.dtype)                  # (S, dh)
    k = (jnp.dot(x, wk_ref[0], preferred_element_type=jnp.float32)
         + bk_ref[0]).astype(x.dtype)
    v = (jnp.dot(x, wv_ref[0], preferred_element_type=jnp.float32)
         + bv_ref[0]).astype(x.dtype)

    # q @ k^T without an explicit transpose (contract last dims).
    s = jax.lax.dot_general(q, k, (((1,), (1,)), ((), ())),
                            preferred_element_type=jnp.float32)
    s = s * scale + bias_ref[0]                        # (S, S) + (1, S)
    m = jnp.max(s, axis=-1, keepdims=True)
    p = jnp.exp(s - m)
    p = p * pl.reciprocal(jnp.sum(p, axis=-1, keepdims=True), approx=True)

    pv = jnp.dot(p.astype(x.dtype), v,
                 preferred_element_type=jnp.float32)   # (S, dh)
    # concat(heads) @ Wo == sum_h head_h @ Wo[h] -> no lane concat needed.
    acc_ref[...] += jnp.dot(pv.astype(x.dtype), wo_ref[0],
                            preferred_element_type=jnp.float32)

    @pl.when(head == pl.num_programs(1) - 1)
    def _():
        o_ref[0] = _layernorm_rows(acc_ref[...], g_ref[...], bb_ref[...],
                                   eps).astype(o_ref.dtype)


def attention_block(x, bias, lp, *, num_heads, eps=LN_EPS):
    """x: [B, S, D] bf16; bias: [B, 1, S] f32 (0 keep / -1e9 pad) -> [B, S, D]."""
    B, S, D = x.shape
    dh = D // num_heads
    scale = 1.0 / (dh ** 0.5)

    est = (2 * 2 * S * D * 2           # x + out blocks, double-buffered bf16
           + S * D * 4                 # f32 accumulator scratch
           + 2 * 3 * D * dh * 2        # per-head Wq/Wk/Wv, double-buffered
           + 2 * dh * D * 2            # per-head Wo, double-buffered
           + 2 * S * S * 4             # score / prob intermediates (f32)
           + 8 * D * 4 + 8 * dh * 4 + 4 * S)
    vmem_limit = int(min(max(2 * est, 16 << 20), 48 << 20))

    return pl.pallas_call(
        functools.partial(_attn_block_kernel, scale=scale, eps=eps),
        out_shape=jax.ShapeDtypeStruct((B, S, D), x.dtype),
        grid=(B, num_heads),
        in_specs=[
            pl.BlockSpec((1, S, D), lambda b, h: (b, 0, 0)),    # x (residual)
            pl.BlockSpec((1, 1, S), lambda b, h: (b, 0, 0)),    # mask bias
            pl.BlockSpec((1, D, dh), lambda b, h: (h, 0, 0)),   # Wq[h]
            pl.BlockSpec((1, D, dh), lambda b, h: (h, 0, 0)),   # Wk[h]
            pl.BlockSpec((1, D, dh), lambda b, h: (h, 0, 0)),   # Wv[h]
            pl.BlockSpec((1, 1, dh), lambda b, h: (h, 0, 0)),   # bq[h]
            pl.BlockSpec((1, 1, dh), lambda b, h: (h, 0, 0)),   # bk[h]
            pl.BlockSpec((1, 1, dh), lambda b, h: (h, 0, 0)),   # bv[h]
            pl.BlockSpec((1, dh, D), lambda b, h: (h, 0, 0)),   # Wo[h]
            pl.BlockSpec((1, D), lambda b, h: (0, 0)),          # bo
            pl.BlockSpec((1, D), lambda b, h: (0, 0)),          # ln1 gamma
            pl.BlockSpec((1, D), lambda b, h: (0, 0)),          # ln1 beta
        ],
        out_specs=pl.BlockSpec((1, S, D), lambda b, h: (b, 0, 0)),
        scratch_shapes=[pltpu.VMEM((S, D), jnp.float32)],
        compiler_params=pltpu.CompilerParams(
            dimension_semantics=("parallel", "arbitrary"),
            vmem_limit_bytes=vmem_limit),
    )(x, bias, lp['wq'], lp['wk'], lp['wv'], lp['bq'], lp['bk'], lp['bv'],
      lp['wo'], lp['bo'], lp['ln1_g'], lp['ln1_b'])


# -------- fused FFN (F-chunked) + residual + LayerNorm epilogue -------------

def _ffn_add_ln_kernel(x_ref, w1_ref, b1_ref, w2_ref, b2_ref, g_ref, bb_ref,
                       o_ref, acc_ref, *, eps):
    f = pl.program_id(1)
    x = x_ref[...]                                     # (tm, D) bf16

    @pl.when(f == 0)
    def _():
        acc_ref[...] = x.astype(jnp.float32) + b2_ref[...]

    h = (jnp.dot(x, w1_ref[...], preferred_element_type=jnp.float32)
         + b1_ref[...])
    # TODO(synk): HF XLNet's 'gelu' is erf-based; tanh approximation used here.
    h = jax.nn.gelu(h, approximate=True)
    acc_ref[...] += jnp.dot(h.astype(x.dtype), w2_ref[...],
                            preferred_element_type=jnp.float32)

    @pl.when(f == pl.num_programs(1) - 1)
    def _():
        o_ref[...] = _layernorm_rows(acc_ref[...], g_ref[...], bb_ref[...],
                                     eps).astype(o_ref.dtype)


def ffn_add_ln(x, w1, b1, w2, b2, gamma, beta, eps=LN_EPS):
    """LayerNorm(gelu(x @ w1 + b1) @ w2 + b2 + x), rows & F-chunks on the grid."""
    M, D = x.shape
    F = w1.shape[1]
    tm = _row_tile(M)
    tf = _col_tile(F)

    est = (2 * tm * D * 2              # x tile, double-buffered bf16
           + 2 * D * tf * 2            # w1 chunk, double-buffered bf16
           + 2 * tf * D * 2            # w2 chunk, double-buffered bf16
           + 2 * (tf + 3 * D) * 4      # bias / gamma / beta blocks
           + tm * D * 4                # f32 accumulator scratch
           + 2 * tm * D * 2            # output tile, double-buffered bf16
           + tm * tf * 6)              # GELU intermediate (f32 + bf16 copy)
    vmem_limit = int(min(max(2 * est, 16 << 20), 48 << 20))

    return pl.pallas_call(
        functools.partial(_ffn_add_ln_kernel, eps=eps),
        out_shape=jax.ShapeDtypeStruct((M, D), x.dtype),
        grid=(M // tm, F // tf),
        in_specs=[pl.BlockSpec((tm, D), lambda i, f: (i, 0)),
                  pl.BlockSpec((D, tf), lambda i, f: (0, f)),
                  pl.BlockSpec((1, tf), lambda i, f: (0, f)),
                  pl.BlockSpec((tf, D), lambda i, f: (f, 0)),
                  pl.BlockSpec((1, D), lambda i, f: (0, 0)),
                  pl.BlockSpec((1, D), lambda i, f: (0, 0)),
                  pl.BlockSpec((1, D), lambda i, f: (0, 0))],
        out_specs=pl.BlockSpec((tm, D), lambda i, f: (i, 0)),
        scratch_shapes=[pltpu.VMEM((tm, D), jnp.float32)],
        compiler_params=pltpu.CompilerParams(
            dimension_semantics=("parallel", "arbitrary"),
            vmem_limit_bytes=vmem_limit),
    )(x, w1, b1, w2, b2, gamma, beta)


# ----------------------------- model (glue) --------------------------------

def text_encoder_forward(params, text, mask, *, num_heads=NUM_HEADS):
    """Equivalent of TextEncoder.forward(x) with x = (text, mask).

    text: int32 [B, S] token ids;  mask: [B, S], 1 = attend / 0 = padding.
    Returns [B, D] float32  (== outputs[0][:, 0, :]).
    """
    h = jnp.take(params['word_emb'], text, axis=0)              # [B, S, D] bf16
    B, S, D = h.shape
    bias = ((1.0 - mask.astype(jnp.float32)) * -1e9).reshape(B, 1, S)
    for lp in params['layers']:
        h = attention_block(h, bias, lp, num_heads=num_heads)   # [B, S, D]
        h = ffn_add_ln(h.reshape(B * S, D), lp['w1'], lp['b1'], lp['w2'],
                       lp['b2'], lp['ln2_g'], lp['ln2_b']).reshape(B, S, D)
    return h[:, 0, :].astype(jnp.float32)


def init_params(key, vocab, D, F, num_layers, num_heads=NUM_HEADS):
    dh = D // num_heads
    keys = jax.random.split(key, 1 + num_layers)

    def _w(k, shape):
        return (jax.random.normal(k, shape, jnp.float32) * 0.02).astype(jnp.bfloat16)

    params = {
        'word_emb': _w(keys[0], (vocab, D)),
        'layers': [],
    }
    for l in range(num_layers):
        ks = jax.random.split(keys[1 + l], 6)
        lp = {
            # head-major attention weights: leading head axis -> lane-dense blocks
            'wq': _w(ks[0], (num_heads, D, dh)),
            'wk': _w(ks[1], (num_heads, D, dh)),
            'wv': _w(ks[2], (num_heads, D, dh)),
            'bq': jnp.zeros((num_heads, 1, dh), jnp.float32),
            'bk': jnp.zeros((num_heads, 1, dh), jnp.float32),
            'bv': jnp.zeros((num_heads, 1, dh), jnp.float32),
            'wo': _w(ks[3], (num_heads, dh, D)),
            'bo': jnp.zeros((1, D), jnp.float32),
            'w1': _w(ks[4], (D, F)),
            'b1': jnp.zeros((1, F), jnp.float32),
            'w2': _w(ks[5], (F, D)),
            'b2': jnp.zeros((1, D), jnp.float32),
            'ln1_g': jnp.ones((1, D), jnp.float32),
            'ln1_b': jnp.zeros((1, D), jnp.float32),
            'ln2_g': jnp.ones((1, D), jnp.float32),
            'ln2_b': jnp.zeros((1, D), jnp.float32),
        }
        params['layers'].append(lp)
    return params


if __name__ == "__main__":
    B, S, D, F, VOCAB, LAYERS = 2, 8, 32, 64, 100, 2

    root = jax.random.PRNGKey(0)
    k_params, k_text = jax.random.split(root)

    params = init_params(k_params, VOCAB, D, F, LAYERS, NUM_HEADS)
    text = jax.random.randint(k_text, (B, S), 0, VOCAB, dtype=jnp.int32)
    # second sequence has 2 padding tokens at the end
    mask = jnp.array([[1] * S, [1] * (S - 2) + [0] * 2], dtype=jnp.float32)

    out = text_encoder_forward(params, text, mask)   # [B, D]
    out = jax.block_until_ready(out)

    assert out.shape == (B, D), out.shape
    assert jnp.all(jnp.isfinite(out))
    print("KERNEL_OK")
</pallas_src>

<mosaic_0001>
module attributes {stable_mosaic.version = 11 : i64} {
  func.func @_attn_block_kernel(%arg0: i32, %arg1: i32, %arg2: memref<1x8x32xbf16, #tpu.memory_space<vmem>>, %arg3: memref<1x1x8xf32, #tpu.memory_space<vmem>>, %arg4: memref<1x32x16xbf16, #tpu.memory_space<vmem>>, %arg5: memref<1x32x16xbf16, #tpu.memory_space<vmem>>, %arg6: memref<1x32x16xbf16, #tpu.memory_space<vmem>>, %arg7: memref<1x1x16xf32, #tpu.memory_space<vmem>>, %arg8: memref<1x1x16xf32, #tpu.memory_space<vmem>>, %arg9: memref<1x1x16xf32, #tpu.memory_space<vmem>>, %arg10: memref<1x16x32xbf16, #tpu.memory_space<vmem>>, %arg11: memref<1x32xf32, #tpu.memory_space<vmem>>, %arg12: memref<1x32xf32, #tpu.memory_space<vmem>>, %arg13: memref<1x32xf32, #tpu.memory_space<vmem>>, %arg14: memref<1x8x32xbf16, #tpu.memory_space<vmem>>, %arg15: memref<8x32xf32, #tpu.memory_space<vmem>>) attributes {dimension_semantics = [#tpu.dimension_semantics<parallel>, #tpu.dimension_semantics<arbitrary>], iteration_bounds = array<i64: 2, 2>, scalar_prefetch = 0 : i64, scratch_operands = 1 : i64, tpu.core_type = #tpu.core_type<tc>, window_params = [{transform_indices = @transform_0, window_bounds = array<i64: 1, 8, 32>}, {transform_indices = @transform_1, window_bounds = array<i64: 1, 1, 8>}, {transform_indices = @transform_2, window_bounds = array<i64: 1, 32, 16>}, {transform_indices = @transform_3, window_bounds = array<i64: 1, 32, 16>}, {transform_indices = @transform_4, window_bounds = array<i64: 1, 32, 16>}, {transform_indices = @transform_5, window_bounds = array<i64: 1, 1, 16>}, {transform_indices = @transform_6, window_bounds = array<i64: 1, 1, 16>}, {transform_indices = @transform_7, window_bounds = array<i64: 1, 1, 16>}, {transform_indices = @transform_8, window_bounds = array<i64: 1, 16, 32>}, {pipeline_mode = #tpu.pipeline_mode<synchronous>, transform_indices = @transform_9, window_bounds = array<i64: 1, 32>}, {pipeline_mode = #tpu.pipeline_mode<synchronous>, transform_indices = @transform_10, window_bounds = array<i64: 1, 32>}, {pipeline_mode = #tpu.pipeline_mode<synchronous>, transform_indices = @transform_11, window_bounds = array<i64: 1, 32>}, {transform_indices = @transform_12, window_bounds = array<i64: 1, 8, 32>}]} {
    %c0 = arith.constant 0 : index
    %c0_0 = arith.constant 0 : index
    %c0_1 = arith.constant 0 : index
    %0 = vector.load %arg2[%c0, %c0_0, %c0_1] : memref<1x8x32xbf16, #tpu.memory_space<vmem>>, vector<1x8x32xbf16>
    %1 = vector.shape_cast %0 : vector<1x8x32xbf16> to vector<8x32xbf16>
    %c0_i32 = arith.constant 0 : i32
    %2 = arith.cmpi eq, %arg1, %c0_i32 : i32
    %3 = arith.extui %2 : i1 to i32
    %c0_i32_2 = arith.constant 0 : i32
    %4 = arith.cmpi ne, %3, %c0_i32_2 : i32
    scf.if %4 {
      %58 = arith.extf %1 : vector<8x32xbf16> to vector<8x32xf32>
      %c0_40 = arith.constant 0 : index
      %c0_41 = arith.constant 0 : index
      %59 = vector.load %arg11[%c0_40, %c0_41] : memref<1x32xf32, #tpu.memory_space<vmem>>, vector<1x32xf32>
      %60 = vector.broadcast %59 : vector<1x32xf32> to vector<8x32xf32>
      %61 = arith.addf %58, %60 : vector<8x32xf32>
      %c0_42 = arith.constant 0 : index
      %c0_43 = arith.constant 0 : index
      %62 = vector.load %arg15[%c0_42, %c0_43] : memref<8x32xf32, #tpu.memory_space<vmem>>, vector<8x32xf32>
      tpu.vector_store %arg15[%c0_42, %c0_43], %61 {strides = array<i32>} : memref<8x32xf32, #tpu.memory_space<vmem>>, vector<8x32xf32>,
    } else {
    }
    %c0_3 = arith.constant 0 : index
    %c0_4 = arith.constant 0 : index
    %c0_5 = arith.constant 0 : index
    %5 = vector.load %arg4[%c0_3, %c0_4, %c0_5] : memref<1x32x16xbf16, #tpu.memory_space<vmem>>, vector<1x32x16xbf16>
    %6 = vector.shape_cast %5 : vector<1x32x16xbf16> to vector<32x16xbf16>
    %cst = arith.constant dense<0.000000e+00> : vector<8x16xf32>
    %7 = tpu.matmul %1, %6, %cst {dimension_numbers = #tpu.dot_dimension_numbers<[1], [0], [0], [1], [0, 0, 1, 1], [], []>} : vector<8x32xbf16>, vector<32x16xbf16>, vector<8x16xf32> -> vector<8x16xf32>
    %c0_6 = arith.constant 0 : index
    %c0_7 = arith.constant 0 : index
    %c0_8 = arith.constant 0 : index
    %8 = vector.load %arg7[%c0_6, %c0_7, %c0_8] : memref<1x1x16xf32, #tpu.memory_space<vmem>>, vector<1x1x16xf32>
    %9 = vector.shape_cast %8 : vector<1x1x16xf32> to vector<1x16xf32>
    %10 = vector.broadcast %9 : vector<1x16xf32> to vector<8x16xf32>
    %11 = arith.addf %7, %10 : vector<8x16xf32>
    %12 = arith.truncf %11 : vector<8x16xf32> to vector<8x16xbf16>
    %c0_9 = arith.constant 0 : index
    %c0_10 = arith.constant 0 : index
    %c0_11 = arith.constant 0 : index
    %13 = vector.load %arg5[%c0_9, %c0_10, %c0_11] : memref<1x32x16xbf16, #tpu.memory_space<vmem>>, vector<1x32x16xbf16>
    %14 = vector.shape_cast %13 : vector<1x32x16xbf16> to vector<32x16xbf16>
    %cst_12 = arith.constant dense<0.000000e+00> : vector<8x16xf32>
    %15 = tpu.matmul %1, %14, %cst_12 {dimension_numbers = #tpu.dot_dimension_numbers<[1], [0], [0], [1], [0, 0, 1, 1], [], []>} : vector<8x32xbf16>, vector<32x16xbf16>, vector<8x16xf32> -> vector<8x16xf32>
    %c0_13 = arith.constant 0 : index
    %c0_14 = arith.constant 0 : index
    %c0_15 = arith.constant 0 : index
    %16 = vector.load %arg8[%c0_13, %c0_14, %c0_15] : memref<1x1x16xf32, #tpu.memory_space<vmem>>, vector<1x1x16xf32>
    %17 = vector.shape_cast %16 : vector<1x1x16xf32> to vector<1x16xf32>
    %18 = vector.broadcast %17 : vector<1x16xf32> to vector<8x16xf32>
    %19 = arith.addf %15, %18 : vector<8x16xf32>
    %20 = arith.truncf %19 : vector<8x16xf32> to vector<8x16xbf16>
    %c0_16 = arith.constant 0 : index
    %c0_17 = arith.constant 0 : index
    %c0_18 = arith.constant 0 : index
    %21 = vector.load %arg6[%c0_16, %c0_17, %c0_18] : memref<1x32x16xbf16, #tpu.memory_space<vmem>>, vector<1x32x16xbf16>
    %22 = vector.shape_cast %21 : vector<1x32x16xbf16> to vector<32x16xbf16>
    %cst_19 = arith.constant dense<0.000000e+00> : vector<8x16xf32>
    %23 = tpu.matmul %1, %22, %cst_19 {dimension_numbers = #tpu.dot_dimension_numbers<[1], [0], [0], [1], [0, 0, 1, 1], [], []>} : vector<8x32xbf16>, vector<32x16xbf16>, vector<8x16xf32> -> vector<8x16xf32>
    %c0_20 = arith.constant 0 : index
    %c0_21 = arith.constant 0 : index
    %c0_22 = arith.constant 0 : index
    %24 = vector.load %arg9[%c0_20, %c0_21, %c0_22] : memref<1x1x16xf32, #tpu.memory_space<vmem>>, vector<1x1x16xf32>
    %25 = vector.shape_cast %24 : vector<1x1x16xf32> to vector<1x16xf32>
    %26 = vector.broadcast %25 : vector<1x16xf32> to vector<8x16xf32>
    %27 = arith.addf %23, %26 : vector<8x16xf32>
    %28 = arith.truncf %27 : vector<8x16xf32> to vector<8x16xbf16>
    %cst_23 = arith.constant dense<0.000000e+00> : vector<8x8xf32>
    %29 = tpu.matmul %12, %20, %cst_23 {dimension_numbers = #tpu.dot_dimension_numbers<[1], [1], [0], [0], [0, 0, 1, 0], [], []>} : vector<8x16xbf16>, vector<8x16xbf16>, vector<8x8xf32> -> vector<8x8xf32>
    %cst_24 = arith.constant 2.500000e-01 : f32
    %30 = vector.broadcast %cst_24 : f32 to vector<8x8xf32>
    %31 = arith.mulf %29, %30 : vector<8x8xf32>
    %c0_25 = arith.constant 0 : index
    %c0_26 = arith.constant 0 : index
    %c0_27 = arith.constant 0 : index
    %32 = vector.load %arg3[%c0_25, %c0_26, %c0_27] : memref<1x1x8xf32, #tpu.memory_space<vmem>>, vector<1x1x8xf32>
    %33 = vector.shape_cast %32 : vector<1x1x8xf32> to vector<1x8xf32>
    %34 = vector.broadcast %33 : vector<1x8xf32> to vector<8x8xf32>
    %35 = arith.addf %31, %34 : vector<8x8xf32>
    %cst_28 = arith.constant dense<0xFF800000> : vector<8xf32>
    %36 = vector.multi_reduction <maximumf>, %35, %cst_28 [1] : vector<8x8xf32> to vector<8xf32>
    %37 = vector.shape_cast %36 : vector<8xf32> to vector<8x1xf32>
    %38 = vector.broadcast %37 : vector<8x1xf32> to vector<8x8xf32>
    %39 = arith.subf %35, %38 : vector<8x8xf32>
    %40 = math.exp %39 : vector<8x8xf32>
    %cst_29 = arith.constant dense<0.000000e+00> : vector<8xf32>
    %41 = vector.multi_reduction <add>, %40, %cst_29 [1] : vector<8x8xf32> to vector<8xf32>
    %42 = vector.shape_cast %41 : vector<8xf32> to vector<8x1xf32>
    %43 = tpu.reciprocal %42 {approx = true} : vector<8x1xf32> -> vector<8x1xf32>
    %44 = vector.broadcast %43 : vector<8x1xf32> to vector<8x8xf32>
    %45 = arith.mulf %40, %44 : vector<8x8xf32>
    %46 = arith.truncf %45 : vector<8x8xf32> to vector<8x8xbf16>
    %cst_30 = arith.constant dense<0.000000e+00> : vector<8x16xf32>
    %47 = tpu.matmul %46, %28, %cst_30 {dimension_numbers = #tpu.dot_dimension_numbers<[1], [0], [0], [1], [0, 0, 1, 1], [], []>} : vector<8x8xbf16>, vector<8x16xbf16>, vector<8x16xf32> -> vector<8x16xf32>
    %c0_31 = arith.constant 0 : index
    %c0_32 = arith.constant 0 : index
    %48 = vector.load %arg15[%c0_31, %c0_32] : memref<8x32xf32, #tpu.memory_space<vmem>>, vector<8x32xf32>
    %49 = arith.truncf %47 : vector<8x16xf32> to vector<8x16xbf16>
    %c0_33 = arith.constant 0 : index
    %c0_34 = arith.constant 0 : index
    %c0_35 = arith.constant 0 : index
    %50 = vector.load %arg10[%c0_33, %c0_34, %c0_35] : memref<1x16x32xbf16, #tpu.memory_space<vmem>>, vector<1x16x32xbf16>
    %51 = vector.shape_cast %50 : vector<1x16x32xbf16> to vector<16x32xbf16>
    %cst_36 = arith.constant dense<0.000000e+00> : vector<8x32xf32>
    %52 = tpu.matmul %49, %51, %cst_36 {dimension_numbers = #tpu.dot_dimension_numbers<[1], [0], [0], [1], [0, 0, 1, 1], [], []>} : vector<8x16xbf16>, vector<16x32xbf16>, vector<8x32xf32> -> vector<8x32xf32>
    %53 = arith.addf %48, %52 : vector<8x32xf32>
    %c0_37 = arith.constant 0 : index
    %c0_38 = arith.constant 0 : index
    %54 = vector.load %arg15[%c0_37, %c0_38] : memref<8x32xf32, #tpu.memory_space<vmem>>, vector<8x32xf32>
    tpu.vector_store %arg15[%c0_37, %c0_38], %53 {strides = array<i32>} : memref<8x32xf32, #tpu.memory_space<vmem>>, vector<8x32xf32>,
    %c1_i32 = arith.constant 1 : i32
    %55 = arith.cmpi eq, %arg1, %c1_i32 : i32
    %56 = arith.extui %55 : i1 to i32
    %c0_i32_39 = arith.constant 0 : i32
    %57 = arith.cmpi ne, %56, %c0_i32_39 : i32
    scf.if %57 {
      %c0_40 = arith.constant 0 : index
      %c0_41 = arith.constant 0 : index
      %58 = vector.load %arg15[%c0_40, %c0_41] : memref<8x32xf32, #tpu.memory_space<vmem>>, vector<8x32xf32>
      %c0_42 = arith.constant 0 : index
      %c0_43 = arith.constant 0 : index
      %59 = vector.load %arg12[%c0_42, %c0_43] : memref<1x32xf32, #tpu.memory_space<vmem>>, vector<1x32xf32>
      %c0_44 = arith.constant 0 : index
      %c0_45 = arith.constant 0 : index
      %60 = vector.load %arg13[%c0_44, %c0_45] : memref<1x32xf32, #tpu.memory_space<vmem>>, vector<1x32xf32>
      %cst_46 = arith.constant dense<0.000000e+00> : vector<8xf32>
      %61 = vector.multi_reduction <add>, %58, %cst_46 [1] : vector<8x32xf32> to vector<8xf32>
      %62 = vector.shape_cast %61 : vector<8xf32> to vector<8x1xf32>
      %63 = arith.mulf %58, %58 : vector<8x32xf32>
      %cst_47 = arith.constant dense<0.000000e+00> : vector<8xf32>
      %64 = vector.multi_reduction <add>, %63, %cst_47 [1] : vector<8x32xf32> to vector<8xf32>
      %65 = vector.shape_cast %64 : vector<8xf32> to vector<8x1xf32>
      %cst_48 = arith.constant 3.125000e-02 : f32
      %66 = vector.broadcast %cst_48 : f32 to vector<8x1xf32>
      %67 = arith.mulf %62, %66 : vector<8x1xf32>
      %cst_49 = arith.constant 3.125000e-02 : f32
      %68 = vector.broadcast %cst_49 : f32 to vector<8x1xf32>
      %69 = arith.mulf %65, %68 : vector<8x1xf32>
      %70 = arith.mulf %67, %67 : vector<8x1xf32>
      %71 = arith.subf %69, %70 : vector<8x1xf32>
      %cst_50 = arith.constant 0.000000e+00 : f32
      %72 = vector.broadcast %cst_50 : f32 to vector<8x1xf32>
      %73 = arith.maximumf %71, %72 : vector<8x1xf32>
      %74 = vector.broadcast %67 : vector<8x1xf32> to vector<8x32xf32>
      %75 = arith.subf %58, %74 : vector<8x32xf32>
      %cst_51 = arith.constant 9.99999996E-13 : f32
      %76 = vector.broadcast %cst_51 : f32 to vector<8x1xf32>
      %77 = arith.addf %73, %76 : vector<8x1xf32>
      %78 = math.rsqrt %77 : vector<8x1xf32>
      %79 = vector.broadcast %78 : vector<8x1xf32> to vector<8x32xf32>
      %80 = arith.mulf %75, %79 : vector<8x32xf32>
      %81 = vector.broadcast %59 : vector<1x32xf32> to vector<8x32xf32>
      %82 = arith.mulf %80, %81 : vector<8x32xf32>
      %83 = vector.broadcast %60 : vector<1x32xf32> to vector<8x32xf32>
      %84 = arith.addf %82, %83 : vector<8x32xf32>
      %85 = arith.truncf %84 : vector<8x32xf32> to vector<8x32xbf16>
      %c0_52 = arith.constant 0 : index
      %c0_53 = arith.constant 0 : index
      %c0_54 = arith.constant 0 : index
      %86 = vector.load %arg14[%c0_52, %c0_53, %c0_54] : memref<1x8x32xbf16, #tpu.memory_space<vmem>>, vector<1x8x32xbf16>
      %87 = vector.shape_cast %86 : vector<1x8x32xbf16> to vector<8x32xbf16>
      %88 = vector.shape_cast %85 : vector<8x32xbf16> to vector<1x8x32xbf16>
      tpu.vector_store %arg14[%c0_52, %c0_53, %c0_54], %88 {strides = array<i32>} : memref<1x8x32xbf16, #tpu.memory_space<vmem>>, vector<1x8x32xbf16>,
    } else {
    }
    return
  }
  func.func @transform_0(%arg0: i32, %arg1: i32) -> (i32, i32, i32) {
    %c0_i32 = arith.constant 0 : i32
    %c0_i32_0 = arith.constant 0 : i32
    %c0_i32_1 = arith.constant 0 : i32
    return %arg0, %c0_i32, %c0_i32_0 : i32, i32, i32
  }
  func.func @transform_1(%arg0: i32, %arg1: i32) -> (i32, i32, i32) {
    %c0_i32 = arith.constant 0 : i32
    %c0_i32_0 = arith.constant 0 : i32
    %c0_i32_1 = arith.constant 0 : i32
    return %arg0, %c0_i32, %c0_i32_0 : i32, i32, i32
  }
  func.func @transform_2(%arg0: i32, %arg1: i32) -> (i32, i32, i32) {
    %c0_i32 = arith.constant 0 : i32
    %c0_i32_0 = arith.constant 0 : i32
    %c0_i32_1 = arith.constant 0 : i32
    return %arg1, %c0_i32, %c0_i32_0 : i32, i32, i32
  }
  func.func @transform_3(%arg0: i32, %arg1: i32) -> (i32, i32, i32) {
    %c0_i32 = arith.constant 0 : i32
    %c0_i32_0 = arith.constant 0 : i32
    %c0_i32_1 = arith.constant 0 : i32
    return %arg1, %c0_i32, %c0_i32_0 : i32, i32, i32
  }
  func.func @transform_4(%arg0: i32, %arg1: i32) -> (i32, i32, i32) {
    %c0_i32 = arith.constant 0 : i32
    %c0_i32_0 = arith.constant 0 : i32
    %c0_i32_1 = arith.constant 0 : i32
    return %arg1, %c0_i32, %c0_i32_0 : i32, i32, i32
  }
  func.func @transform_5(%arg0: i32, %arg1: i32) -> (i32, i32, i32) {
    %c0_i32 = arith.constant 0 : i32
    %c0_i32_0 = arith.constant 0 : i32
    %c0_i32_1 = arith.constant 0 : i32
    return %arg1, %c0_i32, %c0_i32_0 : i32, i32, i32
  }
  func.func @transform_6(%arg0: i32, %arg1: i32) -> (i32, i32, i32) {
    %c0_i32 = arith.constant 0 : i32
    %c0_i32_0 = arith.constant 0 : i32
    %c0_i32_1 = arith.constant 0 : i32
    return %arg1, %c0_i32, %c0_i32_0 : i32, i32, i32
  }
  func.func @transform_7(%arg0: i32, %arg1: i32) -> (i32, i32, i32) {
    %c0_i32 = arith.constant 0 : i32
    %c0_i32_0 = arith.constant 0 : i32
    %c0_i32_1 = arith.constant 0 : i32
    return %arg1, %c0_i32, %c0_i32_0 : i32, i32, i32
  }
  func.func @transform_8(%arg0: i32, %arg1: i32) -> (i32, i32, i32) {
    %c0_i32 = arith.constant 0 : i32
    %c0_i32_0 = arith.constant 0 : i32
    %c0_i32_1 = arith.constant 0 : i32
    return %arg1, %c0_i32, %c0_i32_0 : i32, i32, i32
  }
  func.func @transform_9(%arg0: i32, %arg1: i32) -> (i32, i32) {
    %c0_i32 = arith.constant 0 : i32
    %c0_i32_0 = arith.constant 0 : i32
    %c0_i32_1 = arith.constant 0 : i32
    return %c0_i32, %c0_i32_0 : i32, i32
  }
  func.func @transform_10(%arg0: i32, %arg1: i32) -> (i32, i32) {
    %c0_i32 = arith.constant 0 : i32
    %c0_i32_0 = arith.constant 0 : i32
    %c0_i32_1 = arith.constant 0 : i32
    return %c0_i32, %c0_i32_0 : i32, i32
  }
  func.func @transform_11(%arg0: i32, %arg1: i32) -> (i32, i32) {
    %c0_i32 = arith.constant 0 : i32
    %c0_i32_0 = arith.constant 0 : i32
    %c0_i32_1 = arith.constant 0 : i32
    return %c0_i32, %c0_i32_0 : i32, i32
  }
  func.func @transform_12(%arg0: i32, %arg1: i32) -> (i32, i32, i32) {
    %c0_i32 = arith.constant 0 : i32
    %c0_i32_0 = arith.constant 0 : i32
    %c0_i32_1 = arith.constant 0 : i32
    return %arg0, %c0_i32, %c0_i32_0 : i32, i32, i32
  }
}

</mosaic_0001>

<llo_original>
// kernel: tpu_custom_call.1
$region0: #{tpu_custom_call.1}
  #allocation0 [shape = 'u32[]', space=smem, size = 0x4, offset = 0x4, fixed_abs, tag = 'smem constant byte address 0x4 - core index']
  #allocation1 [shape = 'u32[144,128]{1,0:T(1,128)}', space=vmem, size = 0x12000, scoped, tag = 'internal scratch']
  #allocation2 [shape = 'f32[8,32]{1,0:T(8,128)}', space=vmem, size = 0x1000, scoped, tag = 'scratch operand']
  %s0 = inlined_call_operand.vmem [shape: bf16[2,8,32], index: 0, kind: input, shape index: {}]
  %s1 = inlined_call_operand.vmem [shape: f32[2,1,8], index: 1, kind: input, shape index: {}]
  %s2 = inlined_call_operand.vmem [shape: bf16[2,32,16], index: 2, kind: input, shape index: {}]
  %s3 = inlined_call_operand.vmem [shape: bf16[2,32,16], index: 3, kind: input, shape index: {}]
  %s4 = inlined_call_operand.vmem [shape: bf16[2,32,16], index: 4, kind: input, shape index: {}]
  %s5 = inlined_call_operand.vmem [shape: f32[2,1,16], index: 5, kind: input, shape index: {}]
  %s6 = inlined_call_operand.vmem [shape: f32[2,1,16], index: 6, kind: input, shape index: {}]
  %s7 = inlined_call_operand.vmem [shape: f32[2,1,16], index: 7, kind: input, shape index: {}]
  %s8 = inlined_call_operand.vmem [shape: bf16[2,16,32], index: 8, kind: input, shape index: {}]
  %s9 = inlined_call_operand.vmem [shape: f32[1,32], index: 9, kind: input, shape index: {}]
  %s10 = inlined_call_operand.vmem [shape: f32[1,32], index: 10, kind: input, shape index: {}]
  %s11 = inlined_call_operand.vmem [shape: f32[1,32], index: 11, kind: input, shape index: {}]
  %s12 = inlined_call_operand.hbm [shape: bf16[2,8,32], index: 12, kind: output, shape index: {}]
  %s13 = sld [smem:[#allocation0]]
  $region89: #{tpu_custom_call.1} parent=0
    _
  %s15 = ssub.s32 1, %s13
  %s16 = scalar_select 0, %s15, %s13
  $region1: #{tpu_custom_call.1} parent=0
    #allocation3 [shape = 'u8[4096]{0}', space=vmem, size = 0x1000, scoped, tag = 'output window, operand 0']
    #allocation4 [shape = 's32[2]{0}', space=sflag, size = 0x8, scoped, tag = 'scoped memory for tpu_custom_call.1']
    %17 = vsyncpa [#allocation4], 0
    %s18 = scalar_lea.sflag [#allocation4], 1
    %19 = vsyncpa %s18, 0
    loop: start=0, step=1, limit=6
    $region2: #{tpu_custom_call.1} parent=1 // loop_pre_header
      _
    $region3: #{tpu_custom_call.1} parent=1 // loop_header
      %s21 = sphi 0, %s25
      %p22 = scmp.ge.s32.totalorder %s21, 6
      %s28 = sphi 0, %s40
      %s29 = sphi 0, %s36
      %s30 = sphi 0, %s28
      %s31 = sphi 0, %s29
      %s32 = sphi 0, %s30
      %s33 = sphi 0, %s31
      %s43 = sphi 0, %s45
      %s46 = sphi 0, %s43
      %s47 = sphi 0, %s46
      %s63 = sphi 0, %s47
      %s69 = sphi 0, %s71
      %s72 = sphi 0, %s69
      %s73 = sphi 0, %s72
      %s89 = sphi 0, %s73
      %s95 = sphi 0, %s97
      %s98 = sphi 0, %s95
      %s99 = sphi 0, %s98
      %s115 = sphi 0, %s99
      %s121 = sphi 0, %s123
      %s124 = sphi 0, %s121
      %s125 = sphi 0, %s124
      %s141 = sphi 0, %s125
      %s147 = sphi 0, %s149
      %s150 = sphi 0, %s147
      %s151 = sphi 0, %s150
      %s167 = sphi 0, %s151
      %s173 = sphi 0, %s175
      %s176 = sphi 0, %s173
      %s177 = sphi 0, %s176
      %s193 = sphi 0, %s177
      %s199 = sphi 0, %s201
      %s202 = sphi 0, %s199
      %s203 = sphi 0, %s202
      %s219 = sphi 0, %s203
      %s225 = sphi 0, %s227
      %s228 = sphi 0, %s225
      %s229 = sphi 0, %s228
      %s245 = sphi 0, %s229
      %s251 = sphi 0, %s253
      %s254 = sphi 0, %s251
      %s255 = sphi 0, %s254
      %s271 = sphi 0, %s255
      %s275 = sphi 0, %s275
      %s277 = sphi 0, %s275
      %s278 = sphi 0, %s277
      %s292 = sphi 0, %s278
      %s296 = sphi 0, %s296
      %s298 = sphi 0, %s296
      %s299 = sphi 0, %s298
      %s313 = sphi 0, %s299
      %s317 = sphi 0, %s317
      %s319 = sphi 0, %s317
      %s320 = sphi 0, %s319
      %s334 = sphi 0, %s320
      %s340 = sphi 0, %s342
      %s343 = sphi 0, %s340
      %s344 = sphi 0, %s343
      %s360 = sphi 0, %s344
    $region4: #{tpu_custom_call.1} parent=1 // loop_header_branch
      %24 = sbr.rel (%p22) target = $region8
    $region5: #{tpu_custom_call.1} parent=1 // loop_body
      %s26 = ssub.s32 %s21, 1
      %s27 = ssub.s32 %s21, 2
      %s34 = sadd.s32 1, %s29
      %p35 = scmp.ge.s32.totalorder %s34, 2
      %s36 = scalar_select %p35, 0, %s34
      %s37 = sadd.s32 1, %s28
      %s38 = scalar_select %p35, %s37, %s28
      %p39 = scmp.ge.s32.totalorder %s38, 2
      %s40 = scalar_select %p39, 0, %s38
      %s41 = ssub.s32 %s28, %s40
      %p42 = scmp.eq.s32.totalorder %s41, 0
      %s44 = sadd.s32 %s43, 1
      %s45 = scalar_select %p42, %s43, %s44
      %p48 = pneg %p42
      %p49 = scmp.eq.s32.totalorder %s21, 3
      %p50 = por %p48, %p49
      %p51 = scmp.ne.s32.totalorder %s43, %s46
      %p52 = scmp.eq.s32.totalorder %s21, 0
      %p53 = por %p51, %p52
      %p54 = scmp.ne.s32.totalorder %s43, %s46
      %p55 = scmp.eq.s32.totalorder %s26, 3
      %p56 = por %p54, %p55
      %p57 = scmp.ne.s32.totalorder %s46, %s47
      %p58 = scmp.eq.s32.totalorder %s26, 0
      %p59 = por %p57, %p58
      %p60 = scmp.ne.s32.totalorder %s46, %s47
      %p61 = scmp.eq.s32.totalorder %s27, 3
      %p62 = por %p60, %p61
      %p64 = scmp.ne.s32.totalorder %s47, %s63
      %p65 = scmp.eq.s32.totalorder %s27, 0
      %p66 = por %p64, %p65
      %s67 = ssub.s32 %s28, %s40
      %p68 = scmp.eq.s32.totalorder %s67, 0
      %s70 = sadd.s32 %s69, 1
      %s71 = scalar_select %p68, %s69, %s70
      %p74 = pneg %p68
      %p75 = scmp.eq.s32.totalorder %s21, 3
      %p76 = por %p74, %p75
      %p77 = scmp.ne.s32.totalorder %s69, %s72
      %p78 = scmp.eq.s32.totalorder %s21, 0
      %p79 = por %p77, %p78
      %p80 = scmp.ne.s32.totalorder %s69, %s72
      %p81 = scmp.eq.s32.totalorder %s26, 3
      %p82 = por %p80, %p81
      %p83 = scmp.ne.s32.totalorder %s72, %s73
      %p84 = scmp.eq.s32.totalorder %s26, 0
      %p85 = por %p83, %p84
      %p86 = scmp.ne.s32.totalorder %s72, %s73
      %p87 = scmp.eq.s32.totalorder %s27, 3
      %p88 = por %p86, %p87
      %p90 = scmp.ne.s32.totalorder %s73, %s89
      %p91 = scmp.eq.s32.totalorder %s27, 0
      %p92 = por %p90, %p91
      %s93 = ssub.s32 %s29, %s36
      %p94 = scmp.eq.s32.totalorder %s93, 0
      %s96 = sadd.s32 %s95, 1
      %s97 = scalar_select %p94, %s95, %s96
      %p100 = pneg %p94
      %p101 = scmp.eq.s32.totalorder %s21, 3
      %p102 = por %p100, %p101
      %p103 = scmp.ne.s32.totalorder %s95, %s98
      %p104 = scmp.eq.s32.totalorder %s21, 0
      %p105 = por %p103, %p104
      %p106 = scmp.ne.s32.totalorder %s95, %s98
      %p107 = scmp.eq.s32.totalorder %s26, 3
      %p108 = por %p106, %p107
      %p109 = scmp.ne.s32.totalorder %s98, %s99
      %p110 = scmp.eq.s32.totalorder %s26, 0
      %p111 = por %p109, %p110
      %p112 = scmp.ne.s32.totalorder %s98, %s99
      %p113 = scmp.eq.s32.totalorder %s27, 3
      %p114 = por %p112, %p113
      %p116 = scmp.ne.s32.totalorder %s99, %s115
      %p117 = scmp.eq.s32.totalorder %s27, 0
      %p118 = por %p116, %p117
      %s119 = ssub.s32 %s29, %s36
      %p120 = scmp.eq.s32.totalorder %s119, 0
      %s122 = sadd.s32 %s121, 1
      %s123 = scalar_select %p120, %s121, %s122
      %p126 = pneg %p120
      %p127 = scmp.eq.s32.totalorder %s21, 3
      %p128 = por %p126, %p127
      %p129 = scmp.ne.s32.totalorder %s121, %s124
      %p130 = scmp.eq.s32.totalorder %s21, 0
      %p131 = por %p129, %p130
      %p132 = scmp.ne.s32.totalorder %s121, %s124
      %p133 = scmp.eq.s32.totalorder %s26, 3
      %p134 = por %p132, %p133
      %p135 = scmp.ne.s32.totalorder %s124, %s125
      %p136 = scmp.eq.s32.totalorder %s26, 0
      %p137 = por %p135, %p136
      %p138 = scmp.ne.s32.totalorder %s124, %s125
      %p139 = scmp.eq.s32.totalorder %s27, 3
      %p140 = por %p138, %p139
      %p142 = scmp.ne.s32.totalorder %s125, %s141
      %p143 = scmp.eq.s32.totalorder %s27, 0
      %p144 = por %p142, %p143
      %s145 = ssub.s32 %s29, %s36
      %p146 = scmp.eq.s32.totalorder %s145, 0
      %s148 = sadd.s32 %s147, 1
      %s149 = scalar_select %p146, %s147, %s148
      %p152 = pneg %p146
      %p153 = scmp.eq.s32.totalorder %s21, 3
      %p154 = por %p152, %p153
      %p155 = scmp.ne.s32.totalorder %s147, %s150
      %p156 = scmp.eq.s32.totalorder %s21, 0
      %p157 = por %p155, %p156
      %p158 = scmp.ne.s32.totalorder %s147, %s150
      %p159 = scmp.eq.s32.totalorder %s26, 3
      %p160 = por %p158, %p159
      %p161 = scmp.ne.s32.totalorder %s150, %s151
      %p162 = scmp.eq.s32.totalorder %s26, 0
      %p163 = por %p161, %p162
      %p164 = scmp.ne.s32.totalorder %s150, %s151
      %p165 = scmp.eq.s32.totalorder %s27, 3
      %p166 = por %p164, %p165
      %p168 = scmp.ne.s32.totalorder %s151, %s167
      %p169 = scmp.eq.s32.totalorder %s27, 0
      %p170 = por %p168, %p169
      %s171 = ssub.s32 %s29, %s36
      %p172 = scmp.eq.s32.totalorder %s171, 0
      %s174 = sadd.s32 %s173, 1
      %s175 = scalar_select %p172, %s173, %s174
      %p178 = pneg %p172
      %p179 = scmp.eq.s32.totalorder %s21, 3
      %p180 = por %p178, %p179
      %p181 = scmp.ne.s32.totalorder %s173, %s176
      %p182 = scmp.eq.s32.totalorder %s21, 0
      %p183 = por %p181, %p182
      %p184 = scmp.ne.s32.totalorder %s173, %s176
      %p185 = scmp.eq.s32.totalorder %s26, 3
      %p186 = por %p184, %p185
      %p187 = scmp.ne.s32.totalorder %s176, %s177
      %p188 = scmp.eq.s32.totalorder %s26, 0
      %p189 = por %p187, %p188
      %p190 = scmp.ne.s32.totalorder %s176, %s177
      %p191 = scmp.eq.s32.totalorder %s27, 3
      %p192 = por %p190, %p191
      %p194 = scmp.ne.s32.totalorder %s177, %s193
      %p195 = scmp.eq.s32.totalorder %s27, 0
      %p196 = por %p194, %p195
      %s197 = ssub.s32 %s29, %s36
      %p198 = scmp.eq.s32.totalorder %s197, 0
      %s200 = sadd.s32 %s199, 1
      %s201 = scalar_select %p198, %s199, %s200
      %p204 = pneg %p198
      %p205 = scmp.eq.s32.totalorder %s21, 3
      %p206 = por %p204, %p205
      %p207 = scmp.ne.s32.totalorder %s199, %s202
      %p208 = scmp.eq.s32.totalorder %s21, 0
      %p209 = por %p207, %p208
      %p210 = scmp.ne.s32.totalorder %s199, %s202
      %p211 = scmp.eq.s32.totalorder %s26, 3
      %p212 = por %p210, %p211
      %p213 = scmp.ne.s32.totalorder %s202, %s203
      %p214 = scmp.eq.s32.totalorder %s26, 0
      %p215 = por %p213, %p214
      %p216 = scmp.ne.s32.totalorder %s202, %s203
      %p217 = scmp.eq.s32.totalorder %s27, 3
      %p218 = por %p216, %p217
      %p220 = scmp.ne.s32.totalorder %s203, %s219
      %p221 = scmp.eq.s32.totalorder %s27, 0
      %p222 = por %p220, %p221
      %s223 = ssub.s32 %s29, %s36
      %p224 = scmp.eq.s32.totalorder %s223, 0
      %s226 = sadd.s32 %s225, 1
      %s227 = scalar_select %p224, %s225, %s226
      %p230 = pneg %p224
      %p231 = scmp.eq.s32.totalorder %s21, 3
      %p232 = por %p230, %p231
      %p233 = scmp.ne.s32.totalorder %s225, %s228
      %p234 = scmp.eq.s32.totalorder %s21, 0
      %p235 = por %p233, %p234
      %p236 = scmp.ne.s32.totalorder %s225, %s228
      %p237 = scmp.eq.s32.totalorder %s26, 3
      %p238 = por %p236, %p237
      %p239 = scmp.ne.s32.totalorder %s228, %s229
      %p240 = scmp.eq.s32.totalorder %s26, 0
      %p241 = por %p239, %p240
      %p242 = scmp.ne.s32.totalorder %s228, %s229
      %p243 = scmp.eq.s32.totalorder %s27, 3
      %p244 = por %p242, %p243
      %p246 = scmp.ne.s32.totalorder %s229, %s245
      %p247 = scmp.eq.s32.totalorder %s27, 0
      %p248 = por %p246, %p247
      %s249 = ssub.s32 %s29, %s36
      %p250 = scmp.eq.s32.totalorder %s249, 0
      %s252 = sadd.s32 %s251, 1
      %s253 = scalar_select %p250, %s251, %s252
      %p256 = pneg %p250
      %p257 = scmp.eq.s32.totalorder %s21, 3
      %p258 = por %p256, %p257
      %p259 = scmp.ne.s32.totalorder %s251, %s254
      %p260 = scmp.eq.s32.totalorder %s21, 0
      %p261 = por %p259, %p260
      %p262 = scmp.ne.s32.totalorder %s251, %s254
      %p263 = scmp.eq.s32.totalorder %s26, 3
      %p264 = por %p262, %p263
      %p265 = scmp.ne.s32.totalorder %s254, %s255
      %p266 = scmp.eq.s32.totalorder %s26, 0
      %p267 = por %p265, %p266
      %p268 = scmp.ne.s32.totalorder %s254, %s255
      %p269 = scmp.eq.s32.totalorder %s27, 3
      %p270 = por %p268, %p269
      %p272 = scmp.ne.s32.totalorder %s255, %s271
      %p273 = scmp.eq.s32.totalorder %s27, 0
      %p274 = por %p272, %p273
      %s276 = sadd.s32 %s275, 1
      %p279 = scmp.eq.s32.totalorder %s21, 3
      %p280 = scmp.ne.s32.totalorder %s275, %s277
      %p281 = scmp.eq.s32.totalorder %s21, 0
      %p282 = por %p280, %p281
      %p283 = scmp.ne.s32.totalorder %s275, %s277
      %p284 = scmp.eq.s32.totalorder %s26, 3
      %p285 = por %p283, %p284
      %p286 = scmp.ne.s32.totalorder %s277, %s278
      %p287 = scmp.eq.s32.totalorder %s26, 0
      %p288 = por %p286, %p287
      %p289 = scmp.ne.s32.totalorder %s277, %s278
      %p290 = scmp.eq.s32.totalorder %s27, 3
      %p291 = por %p289, %p290
      %p293 = scmp.ne.s32.totalorder %s278, %s292
      %p294 = scmp.eq.s32.totalorder %s27, 0
      %p295 = por %p293, %p294
      %s297 = sadd.s32 %s296, 1
      %p300 = scmp.eq.s32.totalorder %s21, 3
      %p301 = scmp.ne.s32.totalorder %s296, %s298
      %p302 = scmp.eq.s32.totalorder %s21, 0
      %p303 = por %p301, %p302
      %p304 = scmp.ne.s32.totalorder %s296, %s298
      %p305 = scmp.eq.s32.totalorder %s26, 3
      %p306 = por %p304, %p305
      %p307 = scmp.ne.s32.totalorder %s298, %s299
      %p308 = scmp.eq.s32.totalorder %s26, 0
      %p309 = por %p307, %p308
      %p310 = scmp.ne.s32.totalorder %s298, %s299
      %p311 = scmp.eq.s32.totalorder %s27, 3
      %p312 = por %p310, %p311
      %p314 = scmp.ne.s32.totalorder %s299, %s313
      %p315 = scmp.eq.s32.totalorder %s27, 0
      %p316 = por %p314, %p315
      %s318 = sadd.s32 %s317, 1
      %p321 = scmp.eq.s32.totalorder %s21, 3
      %p322 = scmp.ne.s32.totalorder %s317, %s319
      %p323 = scmp.eq.s32.totalorder %s21, 0
      %p324 = por %p322, %p323
      %p325 = scmp.ne.s32.totalorder %s317, %s319
      %p326 = scmp.eq.s32.totalorder %s26, 3
      %p327 = por %p325, %p326
      %p328 = scmp.ne.s32.totalorder %s319, %s320
      %p329 = scmp.eq.s32.totalorder %s26, 0
      %p330 = por %p328, %p329
      %p331 = scmp.ne.s32.totalorder %s319, %s320
      %p332 = scmp.eq.s32.totalorder %s27, 3
      %p333 = por %p331, %p332
      %p335 = scmp.ne.s32.totalorder %s320, %s334
      %p336 = scmp.eq.s32.totalorder %s27, 0
      %p337 = por %p335, %p336
      %s338 = ssub.s32 %s28, %s40
      %p339 = scmp.eq.s32.totalorder %s338, 0
      %s341 = sadd.s32 %s340, 1
      %s342 = scalar_select %p339, %s340, %s341
      %p345 = pneg %p339
      %p346 = scmp.eq.s32.totalorder %s21, 3
      %p347 = por %p345, %p346
      %p348 = scmp.ne.s32.totalorder %s340, %s343
      %p349 = scmp.eq.s32.totalorder %s21, 0
      %p350 = por %p348, %p349
      %p351 = scmp.ne.s32.totalorder %s340, %s343
      %p352 = scmp.eq.s32.totalorder %s26, 3
      %p353 = por %p351, %p352
      %p354 = scmp.ne.s32.totalorder %s343, %s344
      %p355 = scmp.eq.s32.totalorder %s26, 0
      %p356 = por %p354, %p355
      %p357 = scmp.ne.s32.totalorder %s343, %s344
      %p358 = scmp.eq.s32.totalorder %s27, 3
      %p359 = por %p357, %p358
      %p361 = scmp.ne.s32.totalorder %s344, %s360
      %p362 = scmp.eq.s32.totalorder %s27, 0
      %p363 = por %p361, %p362
      %p364 = scmp.le.s32.totalorder 1, %s21
      %p365 = scmp.lt.s32.totalorder %s21, 5
      %p366 = pnand %p364, %p365
      %p367 = pneg %p366
      // Predicated region
      $region9: #{tpu_custom_call.1} parent=5 // pred_check
        _
      $region10: #{tpu_custom_call.1} parent=5 // pred_check_branch
        %369 = sbr.rel (%p366) target = $region12
      $region11: #{tpu_custom_call.1} parent=5 // pred_region
        %s370 = ssub.s32 %s21, 1
        // Predicated region
        $region13: #{tpu_custom_call.1} parent=11 // pred_check
          %p371 = pneg %p288
        $region14: #{tpu_custom_call.1} parent=11 // pred_check_branch
          %373 = sbr.rel (%p371) target = $region16
        $region15: #{tpu_custom_call.1} parent=11 // pred_region
          _
        $region16: #{tpu_custom_call.1} parent=11 // pred_fallthru
          _
        // Predicated region
        $region17: #{tpu_custom_call.1} parent=11 // pred_check
          %p374 = pneg %p309
        $region18: #{tpu_custom_call.1} parent=11 // pred_check_branch
          %376 = sbr.rel (%p374) target = $region20
        $region19: #{tpu_custom_call.1} parent=11 // pred_region
          _
        $region20: #{tpu_custom_call.1} parent=11 // pred_fallthru
          _
        // Predicated region
        $region21: #{tpu_custom_call.1} parent=11 // pred_check
          %p377 = pneg %p330
        $region22: #{tpu_custom_call.1} parent=11 // pred_check_branch
          %379 = sbr.rel (%p377) target = $region24
        $region23: #{tpu_custom_call.1} parent=11 // pred_region
          _
        $region24: #{tpu_custom_call.1} parent=11 // pred_fallthru
          _
      $region12: #{tpu_custom_call.1} parent=5 // pred_fallthru
        _
      %p380 = scmp.lt.s32.totalorder %s21, 4
      // Predicated region
      $region25: #{tpu_custom_call.1} parent=5 // pred_check
        %p381 = pneg %p380
      $region26: #{tpu_custom_call.1} parent=5 // pred_check_branch
        %383 = sbr.rel (%p381) target = $region28
      $region27: #{tpu_custom_call.1} parent=5 // pred_region
        // Predicated region
        $region29: #{tpu_custom_call.1} parent=27 // pred_check
          %p384 = pneg %p53
        $region30: #{tpu_custom_call.1} parent=27 // pred_check_branch
          %386 = sbr.rel (%p384) target = $region32
        $region31: #{tpu_custom_call.1} parent=27 // pred_region
          %p387 = scmp.lt.s32.totalorder %s28, 1
          %s388 = scalar_select %p387, %s28, 1
          %s389 = smul.addr %s388, 4
          %s390 = scalar_lea.vmem %s0, %s389
        $region32: #{tpu_custom_call.1} parent=27 // pred_fallthru
          _
        // Predicated region
        $region33: #{tpu_custom_call.1} parent=27 // pred_check
          %p391 = pneg %p79
        $region34: #{tpu_custom_call.1} parent=27 // pred_check_branch
          %393 = sbr.rel (%p391) target = $region36
        $region35: #{tpu_custom_call.1} parent=27 // pred_region
          %p394 = scmp.lt.s32.totalorder %s28, 1
          %s395 = scalar_select %p394, %s28, 1
          %s396 = scalar_lea.vmem %s1, %s395
        $region36: #{tpu_custom_call.1} parent=27 // pred_fallthru
          _
        // Predicated region
        $region37: #{tpu_custom_call.1} parent=27 // pred_check
          %p397 = pneg %p105
        $region38: #{tpu_custom_call.1} parent=27 // pred_check_branch
          %399 = sbr.rel (%p397) target = $region40
        $region39: #{tpu_custom_call.1} parent=27 // pred_region
          %p400 = scmp.lt.s32.totalorder %s29, 1
          %s401 = scalar_select %p400, %s29, 1
          %s402 = smul.addr %s401, 4
          %s403 = smul.addr %s402, 4
          %s404 = scalar_lea.vmem %s2, %s403
        $region40: #{tpu_custom_call.1} parent=27 // pred_fallthru
          _
        // Predicated region
        $region41: #{tpu_custom_call.1} parent=27 // pred_check
          %p405 = pneg %p131
        $region42: #{tpu_custom_call.1} parent=27 // pred_check_branch
          %407 = sbr.rel (%p405) target = $region44
        $region43: #{tpu_custom_call.1} parent=27 // pred_region
          %p408 = scmp.lt.s32.totalorder %s29, 1
          %s409 = scalar_select %p408, %s29, 1
          %s410 = smul.addr %s409, 4
          %s411 = smul.addr %s410, 4
          %s412 = scalar_lea.vmem %s3, %s411
        $region44: #{tpu_custom_call.1} parent=27 // pred_fallthru
          _
        // Predicated region
        $region45: #{tpu_custom_call.1} parent=27 // pred_check
          %p413 = pneg %p157
        $region46: #{tpu_custom_call.1} parent=27 // pred_check_branch
          %415 = sbr.rel (%p413) target = $region48
        $region47: #{tpu_custom_call.1} parent=27 // pred_region
          %p416 = scmp.lt.s32.totalorder %s29, 1
          %s417 = scalar_select %p416, %s29, 1
          %s418 = smul.addr %s417, 4
          %s419 = smul.addr %s418, 4
          %s420 = scalar_lea.vmem %s4, %s419
        $region48: #{tpu_custom_call.1} parent=27 // pred_fallthru
          _
        // Predicated region
        $region49: #{tpu_custom_call.1} parent=27 // pred_check
          %p421 = pneg %p183
        $region50: #{tpu_custom_call.1} parent=27 // pred_check_branch
          %423 = sbr.rel (%p421) target = $region52
        $region51: #{tpu_custom_call.1} parent=27 // pred_region
          %p424 = scmp.lt.s32.totalorder %s29, 1
          %s425 = scalar_select %p424, %s29, 1
          %s426 = scalar_lea.vmem %s5, %s425
        $region52: #{tpu_custom_call.1} parent=27 // pred_fallthru
          _
        // Predicated region
        $region53: #{tpu_custom_call.1} parent=27 // pred_check
          %p427 = pneg %p209
        $region54: #{tpu_custom_call.1} parent=27 // pred_check_branch
          %429 = sbr.rel (%p427) target = $region56
        $region55: #{tpu_custom_call.1} parent=27 // pred_region
          %p430 = scmp.lt.s32.totalorder %s29, 1
          %s431 = scalar_select %p430, %s29, 1
          %s432 = scalar_lea.vmem %s6, %s431
        $region56: #{tpu_custom_call.1} parent=27 // pred_fallthru
          _
        // Predicated region
        $region57: #{tpu_custom_call.1} parent=27 // pred_check
          %p433 = pneg %p235
        $region58: #{tpu_custom_call.1} parent=27 // pred_check_branch
          %435 = sbr.rel (%p433) target = $region60
        $region59: #{tpu_custom_call.1} parent=27 // pred_region
          %p436 = scmp.lt.s32.totalorder %s29, 1
          %s437 = scalar_select %p436, %s29, 1
          %s438 = scalar_lea.vmem %s7, %s437
        $region60: #{tpu_custom_call.1} parent=27 // pred_fallthru
          _
        // Predicated region
        $region61: #{tpu_custom_call.1} parent=27 // pred_check
          %p439 = pneg %p261
        $region62: #{tpu_custom_call.1} parent=27 // pred_check_branch
          %441 = sbr.rel (%p439) target = $region64
        $region63: #{tpu_custom_call.1} parent=27 // pred_region
          %p442 = scmp.lt.s32.totalorder %s29, 1
          %s443 = scalar_select %p442, %s29, 1
          %s444 = smul.addr %s443, 2
          %s445 = smul.addr %s444, 4
          %s446 = scalar_lea.vmem %s8, %s445
        $region64: #{tpu_custom_call.1} parent=27 // pred_fallthru
          _
      $region28: #{tpu_custom_call.1} parent=5 // pred_fallthru
        _
      %p447 = scmp.le.s32.totalorder 1, %s21
      %p448 = scmp.lt.s32.totalorder %s21, 5
      %p449 = pnand %p447, %p448
      %p450 = pneg %p449
      // Predicated region
      $region65: #{tpu_custom_call.1} parent=5 // pred_check
        _
      $region66: #{tpu_custom_call.1} parent=5 // pred_check_branch
        %452 = sbr.rel (%p449) target = $region68
      $region67: #{tpu_custom_call.1} parent=5 // pred_region
        %s453 = ssub.s32 %s21, 1
        %p454 = scmp.lt.s32.totalorder %s30, 1
        %s455 = scalar_select %p454, %s30, 1
        %s456 = smul.addr %s455, 4
        %s457 = scalar_lea.vmem %s0, %s456
        %p458 = pneg %p59
        %p459 = pneg %p56
        %p460 = scmp.lt.s32.totalorder %s30, 1
        %s461 = scalar_select %p460, %s30, 1
        %s462 = scalar_lea.vmem %s1, %s461
        %p463 = pneg %p85
        %p464 = pneg %p82
        %p465 = scmp.lt.s32.totalorder %s31, 1
        %s466 = scalar_select %p465, %s31, 1
        %s467 = smul.addr %s466, 4
        %s468 = smul.addr %s467, 4
        %s469 = scalar_lea.vmem %s2, %s468
        %p470 = pneg %p111
        %p471 = pneg %p108
        %p472 = scmp.lt.s32.totalorder %s31, 1
        %s473 = scalar_select %p472, %s31, 1
        %s474 = smul.addr %s473, 4
        %s475 = smul.addr %s474, 4
        %s476 = scalar_lea.vmem %s3, %s475
        %p477 = pneg %p137
        %p478 = pneg %p134
        %p479 = scmp.lt.s32.totalorder %s31, 1
        %s480 = scalar_select %p479, %s31, 1
        %s481 = smul.addr %s480, 4
        %s482 = smul.addr %s481, 4
        %s483 = scalar_lea.vmem %s4, %s482
        %p484 = pneg %p163
        %p485 = pneg %p160
        %p486 = scmp.lt.s32.totalorder %s31, 1
        %s487 = scalar_select %p486, %s31, 1
        %s488 = scalar_lea.vmem %s5, %s487
        %p489 = pneg %p189
        %p490 = pneg %p186
        %p491 = scmp.lt.s32.totalorder %s31, 1
        %s492 = scalar_select %p491, %s31, 1
        %s493 = scalar_lea.vmem %s6, %s492
        %p494 = pneg %p215
        %p495 = pneg %p212
        %p496 = scmp.lt.s32.totalorder %s31, 1
        %s497 = scalar_select %p496, %s31, 1
        %s498 = scalar_lea.vmem %s7, %s497
        %p499 = pneg %p241
        %p500 = pneg %p238
        %p501 = scmp.lt.s32.totalorder %s31, 1
        %s502 = scalar_select %p501, %s31, 1
        %s503 = smul.addr %s502, 2
        %s504 = smul.addr %s503, 4
        %s505 = scalar_lea.vmem %s8, %s504
        %p506 = pneg %p267
        %p507 = pneg %p264
        %p508 = pneg %p288
        %p509 = pneg %p285
        %p510 = pneg %p309
        %p511 = pneg %p306
        %p512 = pneg %p330
        %p513 = pneg %p327
        %p514 = pneg %p356
        %p515 = pneg %p353
        %s516 = sand.u32 %s343, 1
        %s517 = scalar_lea.sflag [#allocation4], %s516
        %s518 = sand.u32 %s343, 1
        %s519 = smul.addr %s518, 4
        %s520 = scalar_lea.vmem [#allocation3], %s519
        %p521 = scmp.lt.s32.totalorder %s30, 1
        %s522 = scalar_select %p521, %s30, 1
        %s523 = smul.addr %s522, 4
        %s524 = scalar_lea.vmem %s0, %s523
        %p525 = scmp.lt.s32.totalorder %s30, 1
        %s526 = scalar_select %p525, %s30, 1
        %s527 = scalar_lea.vmem %s1, %s526
        %p528 = scmp.lt.s32.totalorder %s31, 1
        %s529 = scalar_select %p528, %s31, 1
        %s530 = smul.addr %s529, 4
        %s531 = smul.addr %s530, 4
        %s532 = scalar_lea.vmem %s2, %s531
        %p533 = scmp.lt.s32.totalorder %s31, 1
        %s534 = scalar_select %p533, %s31, 1
        %s535 = smul.addr %s534, 4
        %s536 = smul.addr %s535, 4
        %s537 = scalar_lea.vmem %s3, %s536
        %p538 = scmp.lt.s32.totalorder %s31, 1
        %s539 = scalar_select %p538, %s31, 1
        %s540 = smul.addr %s539, 4
        %s541 = smul.addr %s540, 4
        %s542 = scalar_lea.vmem %s4, %s541
        %p543 = scmp.lt.s32.totalorder %s31, 1
        %s544 = scalar_select %p543, %s31, 1
        %s545 = scalar_lea.vmem %s5, %s544
        %p546 = scmp.lt.s32.totalorder %s31, 1
        %s547 = scalar_select %p546, %s31, 1
        %s548 = scalar_lea.vmem %s6, %s547
        %p549 = scmp.lt.s32.totalorder %s31, 1
        %s550 = scalar_select %p549, %s31, 1
        %s551 = scalar_lea.vmem %s7, %s550
        %p552 = scmp.lt.s32.totalorder %s31, 1
        %s553 = scalar_select %p552, %s31, 1
        %s554 = smul.addr %s553, 2
        %s555 = smul.addr %s554, 4
        %s556 = scalar_lea.vmem %s8, %s555
        %v558 = vld [vmem:[%s524] sm:$0xf]
        %p559 = scmp.eq.s32.totalorder %s31, 0
        // Predicated region
        $region69: #{tpu_custom_call.1} parent=67 // pred_check
          %p560 = pneg %p559
        $region70: #{tpu_custom_call.1} parent=67 // pred_check_branch
          %562 = sbr.rel (%p560) target = $region72
        $region71: #{tpu_custom_call.1} parent=67 // pred_region
          %v563 = vunpack.c.l.bf16 %v558
          %v564 = vld [vmem:[%s9] sm:$0x1]
          %v566 = vlaneseq
          %v567 = vshrl.u32 %v566, 7
          %v568 = vsub.s32 0, %v567
          %v569 = vrot.slane %v564, %v568
          %v571 = vadd.f32 %v563, %v569
          %vm572 = vcmask 261120
          %573 = vst.msk [vmem:[#allocation2] sm:$0xff] %vm572, %v571
        $region72: #{tpu_custom_call.1} parent=67 // pred_fallthru
          _
        %v574 = vld [vmem:[%s532] sm:$0xf]
        %v575 = vld [vmem:[%s532 + $0x4] sm:$0xf]
        %v576 = vld [vmem:[%s532 + $0x8] sm:$0xf]
        %v577 = vld [vmem:[%s532 + $0xc] sm:$0xf]
        %v578 = vld [vmem:[%s545] sm:$0x1]
        %v580 = vlaneseq
        %v581 = vshrl.u32 %v580, 7
        %v582 = vsub.s32 0, %v581
        %v583 = vrot.slane %v578, %v582
        %v589 = vunpack.c.l.b16 %v574
        %v590 = vunpack.c.l.b16 %v575
        %v591 = vunpack.c.l.b16 %v576
        %v592 = vunpack.c.l.b16 %v577
        %v593 = vpack.c.b16 %v590, %v589
        %v594 = vpack.c.b16 %v592, %v591
        %vm597 = vcmask 261120
        %v599 = vsel %vm597, %v558, 0
        %601 = vmatprep.subr.bf16.mxu0 0
        %602 = vmatpush1.bf16.msra.mxu0 %v593
        %603 = vmatprep.subr.bf16.mxu0 0
        %604 = vmatpush1.bf16.msra.mxu0 %v594
        %605 = vmatprep.subr.bf16.mxu0 0
        %606 = vmatpush1.bf16.msra.mxu0 0
        %607 = vmatprep.subr.bf16.mxu0 0
        %608 = vmatpush1.bf16.msra.mxu0 0
        %609 = vmatprep.subr.bf16.mxu0 0
        %610 = vmatpush1.bf16.msra.mxu0 0
        %611 = vmatprep.subr.bf16.mxu0 0
        %612 = vmatpush1.bf16.msra.mxu0 0
        %613 = vmatprep.subr.bf16.mxu0 0
        %614 = vmatpush1.bf16.msra.mxu0 0
        %615 = vmatprep.subr.bf16.mxu0 0
        %616 = vmatpush1.bf16.msra.mxu0 0
        %617 = vmatprep.subr.bf16.mxu0 0
        %618 = vmatpush1.bf16.msra.mxu0 0
        %619 = vmatprep.subr.bf16.mxu0 0
        %620 = vmatpush1.bf16.msra.mxu0 0
        %621 = vmatprep.subr.bf16.mxu0 0
        %622 = vmatpush1.bf16.msra.mxu0 0
        %623 = vmatprep.subr.bf16.mxu0 0
        %624 = vmatpush1.bf16.msra.mxu0 0
        %625 = vmatprep.subr.bf16.mxu0 0
        %626 = vmatpush1.bf16.msra.mxu0 0
        %627 = vmatprep.subr.bf16.mxu0 0
        %628 = vmatpush1.bf16.msra.mxu0 0
        %629 = vmatprep.subr.bf16.mxu0 0
        %630 = vmatpush1.bf16.msra.mxu0 0
        %631 = vmatprep.subr.bf16.mxu0 0
        %632 = vmatpush1.bf16.msra.mxu0 0
        %633 = vmatprep.mubr.bf16.mxu0 0
        %634 = vmatmul.mubr.bf16.gmra.mrb[0].mxu0 %v599
        %v635 = vpop.f32.mrb[0].mxu0
        %v636 = vadd.f32 %v583, %v635
        %v637 = vpop.f32.mrb[0].mxu0
        %v638 = vpop.f32.mrb[0].mxu0
        %v639 = vpop.f32.mrb[0].mxu0
        %640 = vdwg.mxu0
        %v641 = vpack.c.bf16 %v636, %v636
        %v642 = vld [vmem:[%s537] sm:$0xf]
        %v643 = vld [vmem:[%s537 + $0x4] sm:$0xf]
        %v644 = vld [vmem:[%s537 + $0x8] sm:$0xf]
        %v645 = vld [vmem:[%s537 + $0xc] sm:$0xf]
        %v646 = vld [vmem:[%s548] sm:$0x1]
        %v648 = vlaneseq
        %v649 = vshrl.u32 %v648, 7
        %v650 = vsub.s32 0, %v649
        %v651 = vrot.slane %v646, %v650
        %v657 = vunpack.c.l.b16 %v642
        %v658 = vunpack.c.l.b16 %v643
        %v659 = vunpack.c.l.b16 %v644
        %v660 = vunpack.c.l.b16 %v645
        %v661 = vpack.c.b16 %v658, %v657
        %v662 = vpack.c.b16 %v660, %v659
        %665 = vmatprep.subr.bf16.mxu0 0
        %666 = vmatpush1.bf16.msra.mxu0 %v661
        %667 = vmatprep.subr.bf16.mxu0 0
        %668 = vmatpush1.bf16.msra.mxu0 %v662
        %669 = vmatprep.subr.bf16.mxu0 0
        %670 = vmatpush1.bf16.msra.mxu0 0
        %671 = vmatprep.subr.bf16.mxu0 0
        %672 = vmatpush1.bf16.msra.mxu0 0
        %673 = vmatprep.subr.bf16.mxu0 0
        %674 = vmatpush1.bf16.msra.mxu0 0
        %675 = vmatprep.subr.bf16.mxu0 0
        %676 = vmatpush1.bf16.msra.mxu0 0
        %677 = vmatprep.subr.bf16.mxu0 0
        %678 = vmatpush1.bf16.msra.mxu0 0
        %679 = vmatprep.subr.bf16.mxu0 0
        %680 = vmatpush1.bf16.msra.mxu0 0
        %681 = vmatprep.subr.bf16.mxu0 0
        %682 = vmatpush1.bf16.msra.mxu0 0
        %683 = vmatprep.subr.bf16.mxu0 0
        %684 = vmatpush1.bf16.msra.mxu0 0
        %685 = vmatprep.subr.bf16.mxu0 0
        %686 = vmatpush1.bf16.msra.mxu0 0
        %687 = vmatprep.subr.bf16.mxu0 0
        %688 = vmatpush1.bf16.msra.mxu0 0
        %689 = vmatprep.subr.bf16.mxu0 0
        %690 = vmatpush1.bf16.msra.mxu0 0
        %691 = vmatprep.subr.bf16.mxu0 0
        %692 = vmatpush1.bf16.msra.mxu0 0
        %693 = vmatprep.subr.bf16.mxu0 0
        %694 = vmatpush1.bf16.msra.mxu0 0
        %695 = vmatprep.subr.bf16.mxu0 0
        %696 = vmatpush1.bf16.msra.mxu0 0
        %697 = vmatprep.mubr.bf16.mxu0 0
        %698 = vmatmul.mubr.bf16.gmra.mrb[0].mxu0 %v599
        %v699 = vpop.f32.mrb[0].mxu0
        %v700 = vadd.f32 %v651, %v699
        %v701 = vpop.f32.mrb[0].mxu0
        %v702 = vpop.f32.mrb[0].mxu0
        %v703 = vpop.f32.mrb[0].mxu0
        %704 = vdwg.mxu0
        %v705 = vpack.c.bf16 %v700, %v700
        %v706 = vld [vmem:[%s542] sm:$0xf]
        %v707 = vld [vmem:[%s542 + $0x4] sm:$0xf]
        %v708 = vld [vmem:[%s542 + $0x8] sm:$0xf]
        %v709 = vld [vmem:[%s542 + $0xc] sm:$0xf]
        %v710 = vld [vmem:[%s551] sm:$0x1]
        %v712 = vlaneseq
        %v713 = vshrl.u32 %v712, 7
        %v714 = vsub.s32 0, %v713
        %v715 = vrot.slane %v710, %v714
        %v721 = vunpack.c.l.b16 %v706
        %v722 = vunpack.c.l.b16 %v707
        %v723 = vunpack.c.l.b16 %v708
        %v724 = vunpack.c.l.b16 %v709
        %v725 = vpack.c.b16 %v722, %v721
        %v726 = vpack.c.b16 %v724, %v723
        %729 = vmatprep.subr.bf16.mxu0 0
        %730 = vmatpush1.bf16.msra.mxu0 %v725
        %731 = vmatprep.subr.bf16.mxu0 0
        %732 = vmatpush1.bf16.msra.mxu0 %v726
        %733 = vmatprep.subr.bf16.mxu0 0
        %734 = vmatpush1.bf16.msra.mxu0 0
        %735 = vmatprep.subr.bf16.mxu0 0
        %736 = vmatpush1.bf16.msra.mxu0 0
        %737 = vmatprep.subr.bf16.mxu0 0
        %738 = vmatpush1.bf16.msra.mxu0 0
        %739 = vmatprep.subr.bf16.mxu0 0
        %740 = vmatpush1.bf16.msra.mxu0 0
        %741 = vmatprep.subr.bf16.mxu0 0
        %742 = vmatpush1.bf16.msra.mxu0 0
        %743 = vmatprep.subr.bf16.mxu0 0
        %744 = vmatpush1.bf16.msra.mxu0 0
        %745 = vmatprep.subr.bf16.mxu0 0
        %746 = vmatpush1.bf16.msra.mxu0 0
        %747 = vmatprep.subr.bf16.mxu0 0
        %748 = vmatpush1.bf16.msra.mxu0 0
        %749 = vmatprep.subr.bf16.mxu0 0
        %750 = vmatpush1.bf16.msra.mxu0 0
        %751 = vmatprep.subr.bf16.mxu0 0
        %752 = vmatpush1.bf16.msra.mxu0 0
        %753 = vmatprep.subr.bf16.mxu0 0
        %754 = vmatpush1.bf16.msra.mxu0 0
        %755 = vmatprep.subr.bf16.mxu0 0
        %756 = vmatpush1.bf16.msra.mxu0 0
        %757 = vmatprep.subr.bf16.mxu0 0
        %758 = vmatpush1.bf16.msra.mxu0 0
        %759 = vmatprep.subr.bf16.mxu0 0
        %760 = vmatpush1.bf16.msra.mxu0 0
        %761 = vmatprep.mubr.bf16.mxu0 0
        %762 = vmatmul.mubr.bf16.gmra.mrb[0].mxu0 %v599
        %v763 = vpop.f32.mrb[0].mxu0
        %v764 = vadd.f32 %v715, %v763
        %v765 = vpop.f32.mrb[0].mxu0
        %v766 = vpop.f32.mrb[0].mxu0
        %v767 = vpop.f32.mrb[0].mxu0
        %768 = vdwg.mxu0
        %v769 = vpack.c.bf16 %v764, %v764
        %vm770 = vcmask 130048
        %v772 = vsel %vm770, %v641, 0
        %v775 = vsel %vm770, %v705, 0
        %777 = vmatprep.subr.bf16.mxu0 0
        %778 = vmatpush1.bf16.xpose.msra.mxu0 %v775
        %779 = vmatprep.subr.bf16.mxu0 0
        %780 = vmatpush1.bf16.xpose.msra.mxu0 0
        %781 = vmatprep.subr.bf16.mxu0 0
        %782 = vmatpush1.bf16.xpose.msra.mxu0 0
        %783 = vmatprep.subr.bf16.mxu0 0
        %784 = vmatpush1.bf16.xpose.msra.mxu0 0
        %785 = vmatprep.subr.bf16.mxu0 0
        %786 = vmatpush1.bf16.xpose.msra.mxu0 0
        %787 = vmatprep.subr.bf16.mxu0 0
        %788 = vmatpush1.bf16.xpose.msra.mxu0 0
        %789 = vmatprep.subr.bf16.mxu0 0
        %790 = vmatpush1.bf16.xpose.msra.mxu0 0
        %791 = vmatprep.subr.bf16.mxu0 0
        %792 = vmatpush1.bf16.xpose.msra.mxu0 0
        %793 = vmatprep.subr.bf16.mxu0 0
        %794 = vmatpush1.bf16.xpose.msra.mxu0 0
        %795 = vmatprep.subr.bf16.mxu0 0
        %796 = vmatpush1.bf16.xpose.msra.mxu0 0
        %797 = vmatprep.subr.bf16.mxu0 0
        %798 = vmatpush1.bf16.xpose.msra.mxu0 0
        %799 = vmatprep.subr.bf16.mxu0 0
        %800 = vmatpush1.bf16.xpose.msra.mxu0 0
        %801 = vmatprep.subr.bf16.mxu0 0
        %802 = vmatpush1.bf16.xpose.msra.mxu0 0
        %803 = vmatprep.subr.bf16.mxu0 0
        %804 = vmatpush1.bf16.xpose.msra.mxu0 0
        %805 = vmatprep.subr.bf16.mxu0 0
        %806 = vmatpush1.bf16.xpose.msra.mxu0 0
        %807 = vmatprep.subr.bf16.mxu0 0
        %808 = vmatpush1.bf16.xpose.msra.mxu0 0
        %809 = vmatprep.mubr.bf16.mxu0 0
        %810 = vmatmul.mubr.bf16.gmra.mrb[0].mxu0 %v772
        %v811 = vpop.f32.mrb[0].mxu0
        %v812 = vadd.f32 0.0, %v811
        %v813 = vpop.f32.mrb[0].mxu0
        %v814 = vpop.f32.mrb[0].mxu0
        %v815 = vpop.f32.mrb[0].mxu0
        %816 = vdwg.mxu0
        %v817 = vmul.f32 %v812, 0.25
        %v818 = vld [vmem:[%s527] sm:$0x1]
        %v820 = vlaneseq
        %v821 = vshrl.u32 %v820, 7
        %v822 = vsub.s32 0, %v821
        %v823 = vrot.slane %v818, %v822
        %v825 = vadd.f32 %v817, %v823
        %vm826 = vcmask 64512
        %v827 = vsel %vm826, %v825, -inf
        %828 = vmax.xlane.f32.xlu0 %v827
        %v829 = vpop.xlane.xlu0 %828
        %v830 = vsub.f32 %v825, %v829
        %v831 = vmul.f32 %v830, 1.442695
        %v832 = vpow.pop %v831
        %v833 = vsel %vm826, %v832, 0.0
        %834 = vadd.xlane.f32.xlu0 %v833
        %v835 = vpop.xlane.xlu0 %834
        %v836 = vrcp.pop %v835
        %v837 = vmul.f32 %v832, %v836
        %v838 = vpack.c.bf16 %v837, %v837
        %v840 = vsel %vm826, %v838, 0
        %vm842 = vcmask 1043456
        %v844 = vsel %vm842, %v769, 0
        %846 = vmatprep.subr.bf16.mxu0 0
        %847 = vmatpush1.bf16.msra.mxu0 %v844
        %848 = vmatprep.subr.bf16.mxu0 0
        %849 = vmatpush1.bf16.msra.mxu0 0
        %850 = vmatprep.subr.bf16.mxu0 0
        %851 = vmatpush1.bf16.msra.mxu0 0
        %852 = vmatprep.subr.bf16.mxu0 0
        %853 = vmatpush1.bf16.msra.mxu0 0
        %854 = vmatprep.subr.bf16.mxu0 0
        %855 = vmatpush1.bf16.msra.mxu0 0
        %856 = vmatprep.subr.bf16.mxu0 0
        %857 = vmatpush1.bf16.msra.mxu0 0
        %858 = vmatprep.subr.bf16.mxu0 0
        %859 = vmatpush1.bf16.msra.mxu0 0
        %860 = vmatprep.subr.bf16.mxu0 0
        %861 = vmatpush1.bf16.msra.mxu0 0
        %862 = vmatprep.subr.bf16.mxu0 0
        %863 = vmatpush1.bf16.msra.mxu0 0
        %864 = vmatprep.subr.bf16.mxu0 0
        %865 = vmatpush1.bf16.msra.mxu0 0
        %866 = vmatprep.subr.bf16.mxu0 0
        %867 = vmatpush1.bf16.msra.mxu0 0
        %868 = vmatprep.subr.bf16.mxu0 0
        %869 = vmatpush1.bf16.msra.mxu0 0
        %870 = vmatprep.subr.bf16.mxu0 0
        %871 = vmatpush1.bf16.msra.mxu0 0
        %872 = vmatprep.subr.bf16.mxu0 0
        %873 = vmatpush1.bf16.msra.mxu0 0
        %874 = vmatprep.subr.bf16.mxu0 0
        %875 = vmatpush1.bf16.msra.mxu0 0
        %876 = vmatprep.subr.bf16.mxu0 0
        %877 = vmatpush1.bf16.msra.mxu0 0
        %878 = vmatprep.mubr.bf16.mxu0 0
        %879 = vmatmul.mubr.bf16.gmra.mrb[0].mxu0 %v840
        %v880 = vpop.f32.mrb[0].mxu0
        %v881 = vadd.f32 0.0, %v880
        %v882 = vpop.f32.mrb[0].mxu0
        %v883 = vpop.f32.mrb[0].mxu0
        %v884 = vpop.f32.mrb[0].mxu0
        %885 = vdwg.mxu0
        %v886 = vld [vmem:[#allocation2] sm:$0xff]
        %v887 = vpack.c.bf16 %v881, %v881
        %v888 = vld [vmem:[%s556] sm:$0xf]
        %v889 = vld [vmem:[%s556 + $0x4] sm:$0xf]
        %v892 = vunpack.c.l.b16 %v888
        %v893 = vunpack.c.l.b16 %v889
        %v894 = vpack.c.b16 %v893, %v892
        %v897 = vsel %vm770, %v887, 0
        %899 = vmatprep.subr.bf16.mxu0 0
        %900 = vmatpush1.bf16.msra.mxu0 %v894
        %901 = vmatprep.subr.bf16.mxu0 0
        %902 = vmatpush1.bf16.msra.mxu0 0
        %903 = vmatprep.subr.bf16.mxu0 0
        %904 = vmatpush1.bf16.msra.mxu0 0
        %905 = vmatprep.subr.bf16.mxu0 0
        %906 = vmatpush1.bf16.msra.mxu0 0
        %907 = vmatprep.subr.bf16.mxu0 0
        %908 = vmatpush1.bf16.msra.mxu0 0
        %909 = vmatprep.subr.bf16.mxu0 0
        %910 = vmatpush1.bf16.msra.mxu0 0
        %911 = vmatprep.subr.bf16.mxu0 0
        %912 = vmatpush1.bf16.msra.mxu0 0
        %913 = vmatprep.subr.bf16.mxu0 0
        %914 = vmatpush1.bf16.msra.mxu0 0
        %915 = vmatprep.subr.bf16.mxu0 0
        %916 = vmatpush1.bf16.msra.mxu0 0
        %917 = vmatprep.subr.bf16.mxu0 0
        %918 = vmatpush1.bf16.msra.mxu0 0
        %919 = vmatprep.subr.bf16.mxu0 0
        %920 = vmatpush1.bf16.msra.mxu0 0
        %921 = vmatprep.subr.bf16.mxu0 0
        %922 = vmatpush1.bf16.msra.mxu0 0
        %923 = vmatprep.subr.bf16.mxu0 0
        %924 = vmatpush1.bf16.msra.mxu0 0
        %925 = vmatprep.subr.bf16.mxu0 0
        %926 = vmatpush1.bf16.msra.mxu0 0
        %927 = vmatprep.subr.bf16.mxu0 0
        %928 = vmatpush1.bf16.msra.mxu0 0
        %929 = vmatprep.subr.bf16.mxu0 0
        %930 = vmatpush1.bf16.msra.mxu0 0
        %931 = vmatprep.mubr.bf16.mxu0 0
        %932 = vmatmul.mubr.bf16.gmra.mrb[0].mxu0 %v897
        %v933 = vpop.f32.mrb[0].mxu0
        %v934 = vadd.f32 0.0, %v933
        %v935 = vpop.f32.mrb[0].mxu0
        %v936 = vpop.f32.mrb[0].mxu0
        %v937 = vpop.f32.mrb[0].mxu0
        %938 = vdwg.mxu0
        %v939 = vadd.f32 %v886, %v934
        %940 = vst.msk [vmem:[#allocation2] sm:$0xff] %vm597, %v939
        %p941 = scmp.eq.s32.totalorder %s31, 1
        // Predicated region
        $region73: #{tpu_custom_call.1} parent=67 // pred_check
          %p942 = pneg %p941
        $region74: #{tpu_custom_call.1} parent=67 // pred_check_branch
          %944 = sbr.rel (%p942) target = $region76
        $region75: #{tpu_custom_call.1} parent=67 // pred_region
          %v945 = vld [vmem:[#allocation2] sm:$0xff]
          %v946 = vld [vmem:[%s10] sm:$0x1]
          %v947 = vld [vmem:[%s11] sm:$0x1]
          %v948 = vsel %vm597, %v945, 0.0
          %949 = vadd.xlane.f32.xlu0 %v948
          %v950 = vpop.xlane.xlu0 %949
          %v951 = vmul.f32 %v945, %v945
          %v952 = vsel %vm597, %v951, 0.0
          %953 = vadd.xlane.f32.xlu0 %v952
          %v954 = vpop.xlane.xlu0 %953
          %v955 = vmul.f32 %v950, 0.03125
          %v956 = vmul.f32 %v954, 0.03125
          %v957 = vmul.f32 %v955, %v955
          %v958 = vsub.f32 %v956, %v957
          %v959 = vmax.f32 %v958, 0.0
          %v960 = vsub.f32 %v945, %v955
          %v961 = vadd.f32 %v959, 1e-12
          %v962 = vrsqrt.pop %v961
          %v963 = vmul.f32 %v960, %v962
          %v965 = vlaneseq
          %v966 = vshrl.u32 %v965, 7
          %v967 = vsub.s32 0, %v966
          %v968 = vrot.slane %v946, %v967
          %v970 = vmul.f32 %v963, %v968
          %v972 = vlaneseq
          %v973 = vshrl.u32 %v972, 7
          %v974 = vsub.s32 0, %v973
          %v975 = vrot.slane %v947, %v974
          %v977 = vadd.f32 %v970, %v975
          %v978 = vpack.c.bf16 %v977, %v977
          %vm979 = vcmask 257024
          %980 = vst.msk [vmem:[%s520] sm:$0xf] %vm979, %v978
        $region76: #{tpu_custom_call.1} parent=67 // pred_fallthru
          _
        %s981 = sand.u32 %s343, 1
        %s982 = scalar_lea.sflag [#allocation4], %s981
        %s983 = sand.u32 %s343, 1
        %s984 = smul.addr %s983, 4
        %s985 = scalar_lea.vmem [#allocation3], %s984
        // Predicated region
        $region77: #{tpu_custom_call.1} parent=67 // pred_check
          %p986 = pneg %p353
        $region78: #{tpu_custom_call.1} parent=67 // pred_check_branch
          %988 = sbr.rel (%p986) target = $region80
        $region79: #{tpu_custom_call.1} parent=67 // pred_region
          %s990 = ssub.s32 64, 64
          %991 = vsyncadd %s982, %s990
          %s992 = smul.addr %s30, 64
          %s993 = scalar_lea.hbm %s12, %s992
          %s995 = sshll.u32 %s985, 4
          %s996 = int_to_ptr.vmem [resolvable:$true] %s995
          %998 = dma.vmem_to_hbm [thread:$0]  %s996, 64, %s993, %s982
        $region80: #{tpu_custom_call.1} parent=67 // pred_fallthru
          _
      $region68: #{tpu_custom_call.1} parent=5 // pred_fallthru
        _
      %p999 = scmp.le.s32.totalorder 2, %s21
      // Predicated region
      $region81: #{tpu_custom_call.1} parent=5 // pred_check
        %p1000 = pneg %p999
      $region82: #{tpu_custom_call.1} parent=5 // pred_check_branch
        %1002 = sbr.rel (%p1000) target = $region84
      $region83: #{tpu_custom_call.1} parent=5 // pred_region
        %s1003 = ssub.s32 %s21, 2
        // Predicated region
        $region85: #{tpu_custom_call.1} parent=83 // pred_check
          %p1004 = pneg %p359
        $region86: #{tpu_custom_call.1} parent=83 // pred_check_branch
          %1006 = sbr.rel (%p1004) target = $region88
        $region87: #{tpu_custom_call.1} parent=83 // pred_region
          %s1007 = sand.u32 %s344, 1
          %s1008 = scalar_lea.sflag [#allocation4], %s1007
          %s1009 = sand.u32 %s344, 1
          %s1010 = smul.addr %s1009, 4
          %s1011 = scalar_lea.vmem [#allocation3], %s1010
          %1012 = dma.done %s1008, 64
        $region88: #{tpu_custom_call.1} parent=83 // pred_fallthru
          _
      $region84: #{tpu_custom_call.1} parent=5 // pred_fallthru
        _
    $region6: #{tpu_custom_call.1} parent=1 // loop_footer
      %s25 = sadd.s32 1, %s21
    $region7: #{tpu_custom_call.1} parent=1 // loop_footer_branch
      %20 = sbr.rel target = $region3
    $region8: #{tpu_custom_call.1} parent=1 // loop_exit
      _
    %1013 = vsyncpa [#allocation4], 1
    %s1014 = scalar_lea.sflag [#allocation4], 1
    %1015 = vsyncpa %s1014, 1

</llo_original>
